<compile_context>
chip_gen: v6e
topology: v6e:2x2x1
jax: 0.10.0
libtpu: 0.0.40
codegen_flags: <defaults>
</compile_context>

<pallas_src>
import jax
import jax.numpy as jnp
from jax.experimental import pallas as pl
from jax.experimental.pallas import tpu as pltpu


def _seq_pool_kernel(x_ref, w_ref, b_ref, o_ref):
    # x_ref: (S_in, Nt)   w_ref: (S_out, S_in)   b_ref: (S_out, 1) f32
    # o_ref: (S_out, Nt)
    acc = jnp.dot(w_ref[...], x_ref[...], preferred_element_type=jnp.float32)
    acc = acc + b_ref[...]                      # bias broadcasts over lanes
    o_ref[...] = acc.astype(o_ref.dtype)


def seq_pooler(x, weight, bias, *, lane_tile_bytes=4 * 1024 * 1024):
    """out[b, j, h] = sum_i weight[j, i] * x[b, i, h] + bias[j]."""
    B, S_in, H = x.shape
    S_out, S_in_w = weight.shape
    assert S_in == S_in_w
    if S_in == S_out:
        # Module is identity when in_seq_len == out_seq_len (no seq_proj).
        return x

    N = B * H
    itemsize = jnp.dtype(x.dtype).itemsize

    # Lane-dense relayout: (B, S_in, H) -> (S_in, B*H).  Done once in XLA.
    x2 = jnp.transpose(x, (1, 0, 2)).reshape(S_in, N)

    # Pick the lane tile: biggest multiple of 128 with ~lane_tile_bytes per
    # input buffer (double-buffered input+output stays well under VMEM on all
    # of v5e / v6e / v7x for typical S_in).
    nt_cap = max(128, (lane_tile_bytes // (S_in * itemsize)) // 128 * 128)
    if N <= nt_cap:
        Nt, N_pad = N, N                       # single full-width block
    else:
        Nt = nt_cap
        N_pad = -(-N // Nt) * Nt
        if N_pad != N:
            x2 = jnp.pad(x2, ((0, 0), (0, N_pad - N)))
    grid = (N_pad // Nt,)

    w = weight.astype(x.dtype)                 # keep MXU operands in x.dtype
    b_col = bias.reshape(S_out, 1).astype(jnp.float32)

    out2 = pl.pallas_call(
        _seq_pool_kernel,
        out_shape=jax.ShapeDtypeStruct((S_out, N_pad), x.dtype),
        grid_spec=pltpu.PrefetchScalarGridSpec(
            num_scalar_prefetch=0,
            grid=grid,
            in_specs=[
                pl.BlockSpec((S_in, Nt), lambda j: (0, j)),     # streamed x
                pl.BlockSpec((S_out, S_in), lambda j: (0, 0)),  # resident W
                pl.BlockSpec((S_out, 1), lambda j: (0, 0)),     # resident bias
            ],
            out_specs=pl.BlockSpec((S_out, Nt), lambda j: (0, j)),
        ),
        compiler_params=pltpu.CompilerParams(
            dimension_semantics=("parallel",),
            vmem_limit_bytes=32 * 1024 * 1024,
        ),
    )(x2, w, b_col)

    out2 = out2[:, :N]
    return out2.reshape(S_out, B, H).transpose(1, 0, 2)


if __name__ == "__main__":
    # Small shapes consistent with the module: in_seq_len=16 -> out_seq_len=8,
    # hidden=32, batch=2.
    B, S_in, S_out, H = 2, 16, 8, 32

    key = jax.random.PRNGKey(0)
    kx, kw, kb = jax.random.split(key, 3)

    x = jax.random.normal(kx, (B, S_in, H), dtype=jnp.float32)

    # PyTorch-style Linear(in_seq_len, out_seq_len) init bounds (deterministic).
    bound = 1.0 / (S_in ** 0.5)
    weight = jax.random.uniform(kw, (S_out, S_in), minval=-bound, maxval=bound,
                                dtype=jnp.float32)
    bias = jax.random.uniform(kb, (S_out,), minval=-bound, maxval=bound,
                              dtype=jnp.float32)

    out = seq_pooler(x, weight, bias)
    out = jax.block_until_ready(out)

    # Pure-JAX reference: transpose -> linear -> transpose (same as torch module).
    ref = jnp.einsum("bih,ji->bjh", x, weight) + bias[None, :, None]
    assert out.shape == (B, S_out, H)
    assert jnp.allclose(out, ref, atol=1e-5, rtol=1e-5)

    # Also exercise the identity path (in_seq_len == out_seq_len).
    w_sq = jnp.eye(S_in, dtype=jnp.float32)
    b_sq = jnp.zeros((S_in,), dtype=jnp.float32)
    assert jnp.array_equal(seq_pooler(x, w_sq, b_sq), x)

    print("KERNEL_OK")
</pallas_src>

<mosaic_0001>
module attributes {stable_mosaic.version = 11 : i64} {
  func.func @_seq_pool_kernel(%arg0: i32, %arg1: memref<16x64xf32, #tpu.memory_space<vmem>>, %arg2: memref<8x16xf32, #tpu.memory_space<vmem>>, %arg3: memref<8x1xf32, #tpu.memory_space<vmem>>, %arg4: memref<8x64xf32, #tpu.memory_space<vmem>>) attributes {dimension_semantics = [#tpu.dimension_semantics<parallel>], iteration_bounds = array<i64: 1>, scalar_prefetch = 0 : i64, scratch_operands = 0 : i64, tpu.core_type = #tpu.core_type<tc>, window_params = [{transform_indices = @transform_0, window_bounds = array<i64: 16, 64>}, {pipeline_mode = #tpu.pipeline_mode<synchronous>, transform_indices = @transform_1, window_bounds = array<i64: 8, 16>}, {pipeline_mode = #tpu.pipeline_mode<synchronous>, transform_indices = @transform_2, window_bounds = array<i64: 8, 1>}, {transform_indices = @transform_3, window_bounds = array<i64: 8, 64>}]} {
    %c0 = arith.constant 0 : index
    %c0_0 = arith.constant 0 : index
    %0 = vector.load %arg2[%c0, %c0_0] : memref<8x16xf32, #tpu.memory_space<vmem>>, vector<8x16xf32>
    %c0_1 = arith.constant 0 : index
    %c0_2 = arith.constant 0 : index
    %1 = vector.load %arg1[%c0_1, %c0_2] : memref<16x64xf32, #tpu.memory_space<vmem>>, vector<16x64xf32>
    %cst = arith.constant dense<0.000000e+00> : vector<8x64xf32>
    %2 = tpu.matmul %0, %1, %cst {dimension_numbers = #tpu.dot_dimension_numbers<[1], [0], [0], [1], [0, 0, 1, 1], [], []>} : vector<8x16xf32>, vector<16x64xf32>, vector<8x64xf32> -> vector<8x64xf32>
    %c0_3 = arith.constant 0 : index
    %c0_4 = arith.constant 0 : index
    %3 = vector.load %arg3[%c0_3, %c0_4] : memref<8x1xf32, #tpu.memory_space<vmem>>, vector<8x1xf32>
    %4 = vector.broadcast %3 : vector<8x1xf32> to vector<8x64xf32>
    %5 = arith.addf %2, %4 : vector<8x64xf32>
    %c0_5 = arith.constant 0 : index
    %c0_6 = arith.constant 0 : index
    %6 = vector.load %arg4[%c0_5, %c0_6] : memref<8x64xf32, #tpu.memory_space<vmem>>, vector<8x64xf32>
    tpu.vector_store %arg4[%c0_5, %c0_6], %5 {strides = array<i32>} : memref<8x64xf32, #tpu.memory_space<vmem>>, vector<8x64xf32>,
    return
  }
  func.func @transform_0(%arg0: i32) -> (i32, i32) {
    %c0_i32 = arith.constant 0 : i32
    %c0_i32_0 = arith.constant 0 : i32
    return %c0_i32, %arg0 : i32, i32
  }
  func.func @transform_1(%arg0: i32) -> (i32, i32) {
    %c0_i32 = arith.constant 0 : i32
    %c0_i32_0 = arith.constant 0 : i32
    %c0_i32_1 = arith.constant 0 : i32
    return %c0_i32, %c0_i32_0 : i32, i32
  }
  func.func @transform_2(%arg0: i32) -> (i32, i32) {
    %c0_i32 = arith.constant 0 : i32
    %c0_i32_0 = arith.constant 0 : i32
    %c0_i32_1 = arith.constant 0 : i32
    return %c0_i32, %c0_i32_0 : i32, i32
  }
  func.func @transform_3(%arg0: i32) -> (i32, i32) {
    %c0_i32 = arith.constant 0 : i32
    %c0_i32_0 = arith.constant 0 : i32
    return %c0_i32, %arg0 : i32, i32
  }
}

</mosaic_0001>

<llo_original>
// kernel: tpu_custom_call.1
$region0: #{tpu_custom_call.1}
  #allocation0 [shape = 'u32[]', space=smem, size = 0x4, offset = 0x4, fixed_abs, tag = 'smem constant byte address 0x4 - core index']
  #allocation1 [shape = 'u32[144,128]{1,0:T(1,128)}', space=vmem, size = 0x12000, scoped, tag = 'internal scratch']
  %s0 = inlined_call_operand.hbm [shape: f32[16,64], index: 0, kind: input, shape index: {}]
  %s1 = inlined_call_operand.vmem [shape: f32[8,16], index: 1, kind: input, shape index: {}]
  %s2 = inlined_call_operand.vmem [shape: f32[8,1], index: 2, kind: input, shape index: {}]
  %s3 = inlined_call_operand.hbm [shape: f32[8,64], index: 3, kind: output, shape index: {}]
  %s4 = sld [smem:[#allocation0]]
  $region26: #{tpu_custom_call.1} parent=0
    _
  %s6 = ssub.s32 1, %s4
  %s7 = scalar_select 0, %s6, %s4
  $region1: #{tpu_custom_call.1} parent=0
    #allocation2 [shape = 'u8[8192]{0}', space=vmem, size = 0x2000, scoped, tag = 'input window, operand 0, single buffered']
    #allocation3 [shape = 's32[1]{0}', space=sflag, size = 0x4, scoped, tag = 'scoped memory for tpu_custom_call.1']
    #allocation4 [shape = 's32[1]{0}', space=sflag, size = 0x4, scoped, tag = 'scoped memory for tpu_custom_call.1']
    #allocation5 [shape = 'u8[4096]{0}', space=vmem, size = 0x1000, scoped, tag = 'output window, operand 0, single buffered']
    %8 = vsyncpa [#allocation3], 0
    %9 = vsyncpa [#allocation4], 0
    // Predicated region
    $region2: #{tpu_custom_call.1} parent=1 // pred_check
      _
    $region3: #{tpu_custom_call.1} parent=1 // pred_check_branch
      %11 = sbr.rel (0) target = $region5
    $region4: #{tpu_custom_call.1} parent=1 // pred_region
      %s13 = ssub.s32 256, 256
      %14 = vsyncadd [#allocation3], %s13
      %s15 = sshll.u32 [#allocation2], 4
      %s16 = int_to_ptr.vmem [resolvable:$true] %s15
      %21 = dma.hbm_to_vmem [thread:$0]  %s0, 256, %s16, [#allocation3], 128, 128, 8
    $region5: #{tpu_custom_call.1} parent=1 // pred_fallthru
      _
    // Predicated region
    $region6: #{tpu_custom_call.1} parent=1 // pred_check
      _
    $region7: #{tpu_custom_call.1} parent=1 // pred_check_branch
      %23 = sbr.rel (0) target = $region9
    $region8: #{tpu_custom_call.1} parent=1 // pred_region
      _
    $region9: #{tpu_custom_call.1} parent=1 // pred_fallthru
      _
    // Predicated region
    $region10: #{tpu_custom_call.1} parent=1 // pred_check
      _
    $region11: #{tpu_custom_call.1} parent=1 // pred_check_branch
      %25 = sbr.rel (0) target = $region13
    $region12: #{tpu_custom_call.1} parent=1 // pred_region
      _
    $region13: #{tpu_custom_call.1} parent=1 // pred_fallthru
      _
    // Predicated region
    $region14: #{tpu_custom_call.1} parent=1 // pred_check
      _
    $region15: #{tpu_custom_call.1} parent=1 // pred_check_branch
      %27 = sbr.rel (0) target = $region17
    $region16: #{tpu_custom_call.1} parent=1 // pred_region
      %28 = dma.done [#allocation3], 256
    $region17: #{tpu_custom_call.1} parent=1 // pred_fallthru
      _
    %v29 = vld [vmem:[%s1] sm:$0xff]
    %v30 = vld [vmem:[#allocation2] sm:$0xff]
    %v31 = vld [vmem:[#allocation2 + $0x8] sm:$0xff]
    %v32 = vld [vmem:[%s2] sm:$0xff]
    %34 = vset.pattern.permute.xlu0 0
    %35 = vperm.xlu0 %34, %v32
    %v36 = vpop.permute.xlu0 %35
    %vm38 = vcmask 130048
    %v40 = vsel %vm38, %v29, 0
    %42 = vmatprep.subr.mxu0 0.0
    %43 = vmatpush1.msra.mxu0 0.0
    %44 = vmatprep.subr.mxu0 0.0
    %45 = vmatpush1.msra.mxu0 0.0
    %46 = vmatprep.subr.mxu0 0.0
    %47 = vmatpush1.msra.mxu0 0.0
    %48 = vmatprep.subr.mxu0 0.0
    %49 = vmatpush1.msra.mxu0 0.0
    %50 = vmatprep.subr.mxu0 0.0
    %51 = vmatpush1.msra.mxu0 0.0
    %52 = vmatprep.subr.mxu0 0.0
    %53 = vmatpush1.msra.mxu0 0.0
    %54 = vmatprep.subr.mxu0 0.0
    %55 = vmatpush1.msra.mxu0 0.0
    %56 = vmatprep.subr.mxu0 0.0
    %57 = vmatpush1.msra.mxu0 0.0
    %58 = vmatprep.subr.mxu0 0.0
    %59 = vmatpush1.msra.mxu0 0.0
    %60 = vmatprep.subr.mxu0 0.0
    %61 = vmatpush1.msra.mxu0 0.0
    %62 = vmatprep.subr.mxu0 0.0
    %63 = vmatpush1.msra.mxu0 0.0
    %64 = vmatprep.subr.mxu0 0.0
    %65 = vmatpush1.msra.mxu0 0.0
    %66 = vmatprep.subr.mxu0 0.0
    %67 = vmatpush1.msra.mxu0 0.0
    %68 = vmatprep.subr.mxu0 0.0
    %69 = vmatpush1.msra.mxu0 0.0
    %70 = vmatprep.subr.mxu0 0.0
    %71 = vmatpush1.msra.mxu0 %v31
    %72 = vmatprep.subr.mxu0 0.0
    %73 = vmatpush1.msra.mxu0 %v30
    %74 = vmatprep.subr.mxu0 0.0
    %75 = vmatpush2.msra.mxu0 0.0
    %76 = vmatprep.subr.mxu0 0.0
    %77 = vmatpush2.msra.mxu0 0.0
    %78 = vmatprep.subr.mxu0 0.0
    %79 = vmatpush2.msra.mxu0 0.0
    %80 = vmatprep.subr.mxu0 0.0
    %81 = vmatpush2.msra.mxu0 0.0
    %82 = vmatprep.subr.mxu0 0.0
    %83 = vmatpush2.msra.mxu0 0.0
    %84 = vmatprep.subr.mxu0 0.0
    %85 = vmatpush2.msra.mxu0 0.0
    %86 = vmatprep.subr.mxu0 0.0
    %87 = vmatpush2.msra.mxu0 0.0
    %88 = vmatprep.subr.mxu0 0.0
    %89 = vmatpush2.msra.mxu0 0.0
    %90 = vmatprep.subr.mxu0 0.0
    %91 = vmatpush2.msra.mxu0 0.0
    %92 = vmatprep.subr.mxu0 0.0
    %93 = vmatpush2.msra.mxu0 0.0
    %94 = vmatprep.subr.mxu0 0.0
    %95 = vmatpush2.msra.mxu0 0.0
    %96 = vmatprep.subr.mxu0 0.0
    %97 = vmatpush2.msra.mxu0 0.0
    %98 = vmatprep.subr.mxu0 0.0
    %99 = vmatpush2.msra.mxu0 0.0
    %100 = vmatprep.subr.mxu0 0.0
    %101 = vmatpush2.msra.mxu0 0.0
    %102 = vmatprep.subr.mxu0 0.0
    %103 = vmatpush2.msra.mxu0 0.0
    %104 = vmatprep.subr.mxu0 0.0
    %105 = vmatpush2.msra.mxu0 0.0
    %106 = vmatprep.mubr.f32.mxu0 0.0
    %107 = vmatmul.mubr.f32.gmra.mxu0 %v40
    %v108 = vpop.f32.mrf.mxu0
    %v109 = vadd.f32 %v36, %v108
    %v110 = vpop.f32.mrf.mxu0
    %111 = vdwg.mxu0
    %vm112 = vcmask 523264
    %113 = vst.msk [vmem:[#allocation5] sm:$0xff] %vm112, %v109
    // Predicated region
    $region18: #{tpu_custom_call.1} parent=1 // pred_check
      _
    $region19: #{tpu_custom_call.1} parent=1 // pred_check_branch
      %115 = sbr.rel (0) target = $region21
    $region20: #{tpu_custom_call.1} parent=1 // pred_region
      %s117 = ssub.s32 128, 128
      %118 = vsyncadd [#allocation4], %s117
      %s120 = sshll.u32 [#allocation5], 4
      %s121 = int_to_ptr.vmem [resolvable:$true] %s120
      %123 = dma.vmem_to_hbm [thread:$0]  %s121, 128, %s3, [#allocation4]
    $region21: #{tpu_custom_call.1} parent=1 // pred_fallthru
      _
    // Predicated region
    $region22: #{tpu_custom_call.1} parent=1 // pred_check
      _
    $region23: #{tpu_custom_call.1} parent=1 // pred_check_branch
      %125 = sbr.rel (0) target = $region25
    $region24: #{tpu_custom_call.1} parent=1 // pred_region
      %126 = dma.done [#allocation4], 128
    $region25: #{tpu_custom_call.1} parent=1 // pred_fallthru
      _
    %127 = vsyncpa [#allocation3], 1
    %128 = vsyncpa [#allocation4], 1

</llo_original>
